<compile_context>
chip_gen: v7x
topology: tpu7x:2x2x1
jax: 0.10.0
libtpu: 0.0.40
codegen_flags: <defaults>
</compile_context>

<pallas_src>
import jax
import jax.numpy as jnp
from jax import lax
from jax.experimental import pallas as pl
from jax.experimental.pallas import tpu as pltpu

# Hyperparameters from Policy.__init__ / WaveNetNN(...)
LAYERS = 6
BLOCKS = 4
N_DILATED = LAYERS * BLOCKS       # 24 gated dilated conv layers
DIL_CH = 32
RES_CH = 32
SKIP_CH = 128
END_CH = 128
IN_CH = 1
OUT_CH = 128
KERNEL_SIZE = 2
SEQ_LEN = 200                     # length after ConstantPad1d((0,200)) + [..., -200:]

# Time-packed layout constants.
LANES = 128
PACK = LANES // RES_CH            # 4 time steps per vreg row
TP = 56                           # packed rows (224 >= 200, multiple of 8 sublanes)
T_PAD = TP * PACK                 # 224 padded time steps (extra steps never feed back)
SKIP_ROW = (SEQ_LEN - 1) // PACK  # packed row holding time step 199 (lane block 3)


# ---------------------------------------------------------------------------
# pltpu.roll convention probe (makes the causal shift robust to either rotate
# direction of the installed Mosaic).
# ---------------------------------------------------------------------------
_ROLL_LIKE_JNP = {}


def _roll_like_jnp(axis):
    if axis not in _ROLL_LIKE_JNP:
        def _k(x_ref, o_ref):
            o_ref[...] = pltpu.roll(x_ref[...], shift=1, axis=axis)
        x = jnp.arange(8 * 128, dtype=jnp.float32).reshape(8, 128)
        vmem = pl.BlockSpec(memory_space=pltpu.MemorySpace.VMEM)
        y = pl.pallas_call(_k, out_shape=jax.ShapeDtypeStruct((8, 128), jnp.float32),
                           in_specs=[vmem], out_specs=vmem)(x)
        _ROLL_LIKE_JNP[axis] = bool(jnp.allclose(y, jnp.roll(x, 1, axis=axis)))
    return _ROLL_LIKE_JNP[axis]


def _rshift(size, shift, axis):
    """Static shift so pltpu.roll(x, _rshift(..), axis) == jnp.roll(x, shift, axis)."""
    return shift if _roll_like_jnp(axis) else (size - shift) % size


# ---------------------------------------------------------------------------
# Pallas kernel
# ---------------------------------------------------------------------------
def policy_kernel(x_ref, sw_ref, sb_ref,
                  wfg_ref, bfg_ref, wzr_ref, br_ref, skb_ref,
                  e1w_ref, e1b_ref, e2w_ref, e2b_ref, hw_ref, hb_ref,
                  out_ref):
    f32 = jnp.float32
    bf16 = jnp.bfloat16

    # start 1x1 conv (input_channels=1) on the time-packed layout: pure VPU op,
    # x_ref already carries x[4r+j] replicated across lane block j.
    h = x_ref[...] * sw_ref[...] + sb_ref[...]                       # (TP, 128) f32

    # Only time step 199 reaches the 1x1 end convs (output_length=1):
    # skip accumulator is a single (1,128) row; per-layer skip biases pre-summed.
    skip = skb_ref[...]                                              # (1, 128) f32

    for l in range(N_DILATED):
        d = 1 << (l % LAYERS)                                        # dilation 1..32

        # causal tap h_past[t] = h[t-d] (zero for t < d), in the packed layout
        if d >= PACK:                                 # whole-row shift: d = 4,8,16,32
            k = d // PACK
            row = lax.broadcasted_iota(jnp.int32, (TP, LANES), 0)
            hp = jnp.where(row >= k,
                           pltpu.roll(h, shift=_rshift(TP, k, 0), axis=0), 0.0)
        else:                                         # d in {1,2}: lane shift + carry
            row = lax.broadcasted_iota(jnp.int32, (TP, LANES), 0)
            lane = lax.broadcasted_iota(jnp.int32, (TP, LANES), 1)
            within = pltpu.roll(h, shift=_rshift(LANES, d * RES_CH, 1), axis=1)
            carried = pltpu.roll(within, shift=_rshift(TP, 1, 0), axis=0)
            wrapped = lane < d * RES_CH               # lane blocks fed from row r-1
            hp = jnp.where(wrapped, carried, within)
            hp = jnp.where(wrapped & (row == 0), 0.0, hp)

        # fused filter|gate: ONE (TP,256)@(256,256) bf16 MXU contraction.
        lhs = jnp.concatenate([hp, h], axis=-1).astype(bf16)         # (TP, 256)
        fg = jnp.dot(lhs, wfg_ref[l], preferred_element_type=f32) + bfg_ref[l]

        # single 64-wide-per-step tanh pass; gate half was pre-scaled by 0.5 so
        # sigmoid(gate) = 0.5 * tanh(gate/2) + 0.5.
        t = jnp.tanh(fg)
        z = t[:, :LANES] * (0.5 * t[:, LANES:] + 0.5)                # (TP, 128)

        # fused residual|skip: ONE (TP,128)@(128,256) bf16 MXU contraction.
        zr = jnp.dot(z.astype(bf16), wzr_ref[l], preferred_element_type=f32)
        h = h + zr[:, :LANES] + br_ref[l]
        skip = skip + zr[SKIP_ROW:SKIP_ROW + 1, LANES:]              # time step 199

    # end network (on the single output row): relu -> 1x1 -> relu -> 1x1
    s = jnp.maximum(skip, 0.0)
    e = jnp.maximum(
        jnp.dot(s.astype(bf16), e1w_ref[...], preferred_element_type=f32)
        + e1b_ref[...], 0.0)
    feat = (jnp.dot(e.astype(bf16), e2w_ref[...], preferred_element_type=f32)
            + e2b_ref[...])

    # fused action|value head, emitted as one lane-dense (1,128) slab:
    # lanes 0-1 = softmax(action logits), lane 2 = value, rest 0.
    hv = (jnp.dot(feat.astype(bf16), hw_ref[...], preferred_element_type=f32)
          + hb_ref[...])                                             # (1, 128)
    lane_o = lax.broadcasted_iota(jnp.int32, (1, LANES), 1)
    is_logit = lane_o < 2
    m = jnp.max(jnp.where(is_logit, hv, -1e30), axis=-1, keepdims=True)
    ex = jnp.where(is_logit, jnp.exp(hv - m), 0.0)
    probs = ex / jnp.sum(ex, axis=-1, keepdims=True)
    out_ref[...] = probs + jnp.where(lane_o == 2, hv, 0.0)


# ---------------------------------------------------------------------------
# Parameters (deterministic synthetic, uniform +-1/sqrt(fan_in) like nn.Conv1d/Linear)
# ---------------------------------------------------------------------------
def init_params(key):
    keys = iter(jax.random.split(key, 64))

    def u(shape, fan_in):
        b = 1.0 / float(fan_in) ** 0.5
        return jax.random.uniform(next(keys), shape, jnp.float32, minval=-b, maxval=b)

    start_w = u((IN_CH, RES_CH), IN_CH)
    start_b = u((1, RES_CH), IN_CH)

    fan_k2 = RES_CH * KERNEL_SIZE
    fw0 = u((N_DILATED, RES_CH, DIL_CH), fan_k2)   # filter tap at t-d
    fw1 = u((N_DILATED, RES_CH, DIL_CH), fan_k2)   # filter tap at t
    fb = u((N_DILATED, 1, DIL_CH), fan_k2)
    gw0 = u((N_DILATED, RES_CH, DIL_CH), fan_k2)
    gw1 = u((N_DILATED, RES_CH, DIL_CH), fan_k2)
    gb = u((N_DILATED, 1, DIL_CH), fan_k2)

    skw = u((N_DILATED, DIL_CH, SKIP_CH), DIL_CH)
    skb = u((N_DILATED, 1, SKIP_CH), DIL_CH)
    rw = u((N_DILATED, DIL_CH, RES_CH), DIL_CH)
    rb = u((N_DILATED, 1, RES_CH), DIL_CH)

    e1w = u((SKIP_CH, END_CH), SKIP_CH)
    e1b = u((1, END_CH), SKIP_CH)
    e2w = u((END_CH, OUT_CH), END_CH)
    e2b = u((1, OUT_CH), END_CH)

    aw = u((OUT_CH, 2), OUT_CH)     # action_head: Linear(128, 2)
    ab = u((1, 2), OUT_CH)
    vw = u((OUT_CH, 1), OUT_CH)     # value_head:  Linear(128, 1)
    vb = u((1, 1), OUT_CH)

    return (start_w, start_b, fw0, fw1, fb, gw0, gw1, gb,
            skw, skb, rw, rb, e1w, e1b, e2w, e2b, aw, ab, vw, vb)


def pack_params(params):
    """Fuse/repack weights for the time-packed bf16 kernel (once, outside hot path)."""
    (start_w, start_b, fw0, fw1, fb, gw0, gw1, gb,
     skw, skb, rw, rb, e1w, e1b, e2w, e2b, aw, ab, vw, vb) = params
    f32, bf16 = jnp.float32, jnp.bfloat16
    eye = jnp.eye(PACK, dtype=f32)

    def bd4(w):  # (L, 32, n) -> (L, 128, 4n) block diagonal over the 4 time blocks
        L, c, n = w.shape
        out = jnp.einsum('jk,lab->ljakb', eye, w)          # (L, 4, 32, 4, n)
        return out.reshape(L, PACK * c, PACK * n)

    # start conv as an elementwise op on the lane-replicated input
    sw_t = jnp.tile(start_w, (1, PACK))                     # (1, 128) f32
    sb_t = jnp.tile(start_b, (1, PACK))                     # (1, 128) f32

    # [filter | 0.5*gate] packed over [h_past rows | h rows]  -> (24, 256, 256) bf16
    w_fg = jnp.concatenate(
        [jnp.concatenate([bd4(fw0), bd4(0.5 * gw0)], axis=-1),
         jnp.concatenate([bd4(fw1), bd4(0.5 * gw1)], axis=-1)], axis=1).astype(bf16)
    b_fg = jnp.concatenate([jnp.tile(fb, (1, 1, PACK)),
                            jnp.tile(0.5 * gb, (1, 1, PACK))], axis=-1)  # (24,1,256)

    # [block-diag residual | skip from time-block 3]  -> (24, 128, 256) bf16
    skw_pad = jnp.concatenate(
        [jnp.zeros((N_DILATED, (PACK - 1) * DIL_CH, SKIP_CH), f32), skw], axis=1)
    w_zr = jnp.concatenate([bd4(rw), skw_pad], axis=-1).astype(bf16)
    b_r = jnp.tile(rb, (1, 1, PACK))                        # (24, 1, 128) f32
    skb_sum = jnp.sum(skb, axis=0)                          # (1, 128) folded skip bias

    # fused action|value head, zero-padded to a full 128-lane output slab
    hw = jnp.concatenate([aw, vw, jnp.zeros((OUT_CH, LANES - 3), f32)],
                         axis=-1).astype(bf16)              # (128, 128)
    hb = jnp.concatenate([ab, vb, jnp.zeros((1, LANES - 3), f32)], axis=-1)

    return (sw_t, sb_t, w_fg, b_fg, w_zr, b_r, skb_sum,
            e1w.astype(bf16), e1b, e2w.astype(bf16), e2b, hw, hb)


# ---------------------------------------------------------------------------
# Wrappers
# ---------------------------------------------------------------------------
def _preprocess(x):
    """Policy.forward glue: reshape -> ConstantPad1d((0,200)) -> [..., -200:]."""
    L = x.shape[1]
    xr = x.reshape(1, 1, L).astype(jnp.float32)
    xp = jnp.pad(xr, ((0, 0), (0, 0), (0, 200)))            # pad 200 zeros on the right
    xp = xp[:, :, -SEQ_LEN:]                                # keep last 200 samples
    return xp[0].T                                          # (200, 1)


def _pack_input(x_tc):
    """(200,1) -> (TP,128): time packed 4-per-row, each sample replicated to 32 lanes."""
    x_flat = jnp.pad(x_tc.reshape(-1), (0, T_PAD - SEQ_LEN))
    xp = x_flat.reshape(TP, PACK)
    return jnp.repeat(xp, RES_CH, axis=1)


def _tcn_heads_forward(x_tc, packed):
    x_rep = _pack_input(x_tc.astype(jnp.float32))
    vmem = pl.BlockSpec(memory_space=pltpu.MemorySpace.VMEM)
    inputs = (x_rep, *packed)
    out = pl.pallas_call(
        policy_kernel,
        out_shape=jax.ShapeDtypeStruct((1, LANES), jnp.float32),
        in_specs=[vmem] * len(inputs),
        out_specs=vmem,
    )(*inputs)
    return out[:, 0:2], out[:, 2:3]


tcn_heads_forward = jax.jit(_tcn_heads_forward)


@jax.jit
def policy_forward(x, packed):
    return _tcn_heads_forward(_preprocess(x), packed)


# ---------------------------------------------------------------------------
# Pure-JAX references (f32) for correctness checking
# ---------------------------------------------------------------------------
def wavenet_heads_ref(x_tc, params):
    (start_w, start_b, fw0, fw1, fb, gw0, gw1, gb,
     skw, skb, rw, rb, e1w, e1b, e2w, e2b, aw, ab, vw, vb) = params
    h = x_tc @ start_w + start_b
    skip = jnp.zeros((SEQ_LEN, SKIP_CH), jnp.float32)
    for l in range(N_DILATED):
        d = 2 ** (l % LAYERS)
        h_past = jnp.concatenate(
            [jnp.zeros((d, RES_CH), jnp.float32), h[:SEQ_LEN - d]], axis=0)
        filt = h_past @ fw0[l] + h @ fw1[l] + fb[l]
        gate = h_past @ gw0[l] + h @ gw1[l] + gb[l]
        z = jnp.tanh(filt) * jax.nn.sigmoid(gate)
        skip = skip + z @ skw[l] + skb[l]
        h = h + z @ rw[l] + rb[l]
    e = jnp.maximum(jnp.maximum(skip, 0.0) @ e1w + e1b, 0.0)
    out = e @ e2w + e2b
    feat = out[-1:, :]
    action = jax.nn.softmax(feat @ aw + ab, axis=-1)
    value = feat @ vw + vb
    return action, value


def policy_ref(x, params):
    return wavenet_heads_ref(_preprocess(x), params)


def _bf16_round_weights(params):
    """Reference params with the same weight quantization the kernel uses (bf16 MXU)."""
    (start_w, start_b, fw0, fw1, fb, gw0, gw1, gb,
     skw, skb, rw, rb, e1w, e1b, e2w, e2b, aw, ab, vw, vb) = params
    q = lambda w: w.astype(jnp.bfloat16).astype(jnp.float32)
    return (start_w, start_b, q(fw0), q(fw1), fb, q(gw0), q(gw1), gb,
            q(skw), skb, q(rw), rb, q(e1w), e1b, q(e2w), e2b, q(aw), ab, q(vw), vb)


# ---------------------------------------------------------------------------
if __name__ == "__main__":
    key = jax.random.PRNGKey(0)
    pkey, xkey, skey = jax.random.split(key, 3)
    params = init_params(pkey)
    params_q = _bf16_round_weights(params)
    packed = pack_params(params)

    # Resolve the pltpu.roll rotate convention before tracing the main kernel.
    _roll_like_jnp(0)
    _roll_like_jnp(1)

    # 1) Module-faithful path. NOTE: pad(0,200) + [..., -200:] makes the TCN input
    #    all zeros for any input length, so the outputs are input-independent
    #    (reproduced literally from the PyTorch code).
    x = jax.random.normal(xkey, (1, 8), jnp.float32)
    action, value = policy_forward(x, packed)
    jax.block_until_ready((action, value))

    ref_action, ref_value = policy_ref(x, params)
    assert action.shape == (1, 2) and value.shape == (1, 1)
    assert bool(jnp.all(jnp.isfinite(action))) and bool(jnp.all(jnp.isfinite(value)))
    assert abs(float(jnp.sum(action)) - 1.0) < 1e-3
    assert bool(jnp.allclose(action, ref_action, atol=1e-1, rtol=1e-1))
    assert bool(jnp.allclose(value, ref_value, atol=1e-1, rtol=1e-1))

    # 2) Data-path validation with NONZERO activations (preprocessing bypassed) so the
    #    packed causal shifts / fused bf16 matmuls are exercised against the references.
    x_tc = jax.random.normal(skey, (SEQ_LEN, IN_CH), jnp.float32)
    a2, v2 = tcn_heads_forward(x_tc, packed)
    jax.block_until_ready((a2, v2))

    ra_q, rv_q = wavenet_heads_ref(x_tc, params_q)   # same weight rounding as kernel
    ra_f, rv_f = wavenet_heads_ref(x_tc, params)     # true f32 module math
    assert bool(jnp.all(jnp.isfinite(a2))) and bool(jnp.all(jnp.isfinite(v2)))
    assert abs(float(jnp.sum(a2)) - 1.0) < 1e-3
    assert bool(jnp.allclose(a2, ra_q, atol=7e-2, rtol=7e-2))
    assert bool(jnp.allclose(v2, rv_q, atol=7e-2, rtol=7e-2))
    assert bool(jnp.allclose(a2, ra_f, atol=1.5e-1, rtol=1.5e-1))
    assert bool(jnp.allclose(v2, rv_f, atol=1.5e-1, rtol=1.5e-1))

    print("KERNEL_OK")
</pallas_src>

<mosaic_0001>
module attributes {stable_mosaic.version = 11 : i64} {
  func.func @_k(%arg0: memref<8x128xf32, #tpu.memory_space<vmem>>, %arg1: memref<8x128xf32, #tpu.memory_space<vmem>>) attributes {dimension_semantics = [], scalar_prefetch = 0 : i64, scratch_operands = 0 : i64, tpu.core_type = #tpu.core_type<tc>} {
    %c0 = arith.constant 0 : index
    %c0_0 = arith.constant 0 : index
    %0 = vector.load %arg0[%c0, %c0_0] : memref<8x128xf32, #tpu.memory_space<vmem>>, vector<8x128xf32>
    %c1_i32 = arith.constant 1 : i32
    %1 = tpu.dynamic_rotate %0 by %c1_i32 dim 0 : vector<8x128xf32>, i32 -> vector<8x128xf32>
    %c0_1 = arith.constant 0 : index
    %c0_2 = arith.constant 0 : index
    %2 = vector.load %arg1[%c0_1, %c0_2] : memref<8x128xf32, #tpu.memory_space<vmem>>, vector<8x128xf32>
    tpu.vector_store %arg1[%c0_1, %c0_2], %1 {strides = array<i32>} : memref<8x128xf32, #tpu.memory_space<vmem>>, vector<8x128xf32>,
    return
  }
}

</mosaic_0001>

<llo_original>
// kernel: tpu_custom_call.1
$region0: #{tpu_custom_call.1}
  #allocation0 [shape = 'u32[]', space=smem, size = 0x4, offset = 0x4, fixed_abs, tag = 'smem constant byte address 0x4 - core index']
  #allocation1 [shape = 'u32[144,128]{1,0:T(1,128)}', space=vmem, size = 0x12000, scoped, tag = 'internal scratch']
  %s0 = inlined_call_operand.hbm [shape: f32[8,128], index: 0, kind: input, shape index: {}]
  %s1 = inlined_call_operand.hbm [shape: f32[8,128], index: 1, kind: output, shape index: {}]
  %s2 = sld [smem:[#allocation0]]
  $region18: #{tpu_custom_call.1} parent=0
    _
  %s4 = ssub.s32 1, %s2
  %s5 = scalar_select 0, %s4, %s2
  $region1: #{tpu_custom_call.1} parent=0
    #allocation2 [shape = 'u8[4096]{0}', space=vmem, size = 0x1000, scoped, tag = 'input window, operand 0, single buffered']
    #allocation3 [shape = 's32[1]{0}', space=sflag, size = 0x4, scoped, tag = 'scoped memory for tpu_custom_call.1']
    #allocation4 [shape = 's32[1]{0}', space=sflag, size = 0x4, scoped, tag = 'scoped memory for tpu_custom_call.1']
    #allocation5 [shape = 'u8[4096]{0}', space=vmem, size = 0x1000, scoped, tag = 'output window, operand 0, single buffered']
    %6 = vsyncpa [#allocation3], 0
    %7 = vsyncpa [#allocation4], 0
    // Predicated region
    $region2: #{tpu_custom_call.1} parent=1 // pred_check
      _
    $region3: #{tpu_custom_call.1} parent=1 // pred_check_branch
      %9 = sbr.rel (0) target = $region5
    $region4: #{tpu_custom_call.1} parent=1 // pred_region
      %s11 = ssub.s32 128, 128
      %12 = vsyncadd [#allocation3], %s11
      %s14 = sshll.u32 [#allocation2], 4
      %s15 = int_to_ptr.vmem [resolvable:$true] %s14
      %17 = dma.hbm_to_vmem [thread:$0]  %s0, 128, %s15, [#allocation3]
    $region5: #{tpu_custom_call.1} parent=1 // pred_fallthru
      _
    // Predicated region
    $region6: #{tpu_custom_call.1} parent=1 // pred_check
      _
    $region7: #{tpu_custom_call.1} parent=1 // pred_check_branch
      %19 = sbr.rel (0) target = $region9
    $region8: #{tpu_custom_call.1} parent=1 // pred_region
      %20 = dma.done [#allocation3], 128
    $region9: #{tpu_custom_call.1} parent=1 // pred_fallthru
      _
    %v21 = vld [vmem:[#allocation2] sm:$0xff]
    %v22 = vrot.slane %v21, 7
    %23 = vst [vmem:[#allocation5] sm:$0xff] %v22
    // Predicated region
    $region10: #{tpu_custom_call.1} parent=1 // pred_check
      _
    $region11: #{tpu_custom_call.1} parent=1 // pred_check_branch
      %25 = sbr.rel (0) target = $region13
    $region12: #{tpu_custom_call.1} parent=1 // pred_region
      %s27 = ssub.s32 128, 128
      %28 = vsyncadd [#allocation4], %s27
      %s30 = sshll.u32 [#allocation5], 4
      %s31 = int_to_ptr.vmem [resolvable:$true] %s30
      %33 = dma.vmem_to_hbm [thread:$0]  %s31, 128, %s1, [#allocation4]
    $region13: #{tpu_custom_call.1} parent=1 // pred_fallthru
      _
    // Predicated region
    $region14: #{tpu_custom_call.1} parent=1 // pred_check
      _
    $region15: #{tpu_custom_call.1} parent=1 // pred_check_branch
      %35 = sbr.rel (0) target = $region17
    $region16: #{tpu_custom_call.1} parent=1 // pred_region
      %36 = dma.done [#allocation4], 128
    $region17: #{tpu_custom_call.1} parent=1 // pred_fallthru
      _
    %37 = vsyncpa [#allocation3], 1
    %38 = vsyncpa [#allocation4], 1

</llo_original>
